<compile_context>
chip_gen: v7x
topology: tpu7x:2x2x1
jax: 0.10.0
libtpu: 0.0.40
codegen_flags: <defaults>
</compile_context>

<pallas_src>
import jax
import jax.numpy as jnp
import numpy as np
from jax.experimental import pallas as pl
from jax.experimental.pallas import tpu as pltpu


def _critic_kernel(obs_ref, act_ref, w1o_ref, w1a_ref, b1_ref,
                   w2_ref, b2_ref, w3_ref, b3_ref, o_ref):
    # layer 1 (+ fused concat): h1 = obs @ W1_obs + act @ W1_act + b1, then ReLU
    h1 = jnp.dot(obs_ref[...], w1o_ref[...], preferred_element_type=jnp.float32)
    h1 = h1 + jnp.dot(act_ref[...], w1a_ref[...], preferred_element_type=jnp.float32)
    h1 = jnp.maximum(h1 + b1_ref[...], 0.0)

    # layer 2: bf16 activations/weights on the MXU, f32 accumulate, bias + ReLU
    h2 = jnp.dot(h1.astype(jnp.bfloat16), w2_ref[...],
                 preferred_element_type=jnp.float32)
    h2 = jnp.maximum(h2 + b2_ref[...], 0.0)

    # layer 3 (out_features=1): lane reduction on the VPU/XLU instead of an
    # N=1 MXU matmul; b3 is an SMEM scalar.
    q = jnp.sum(h2 * w3_ref[...], axis=-1, keepdims=True) + b3_ref[0]
    # TODO(synk): for very large B (>=512) a lane-dense (1, B) output layout
    # would avoid the masked last-dim-1 stores; irrelevant at demo sizes.
    o_ref[...] = q.astype(o_ref.dtype)


def critic_forward(obs, act, params, *, block_b=128):
    """obs: (B, obs_dim) f32, act: (B, act_dim) f32.  Returns (B, 1) f32."""
    w1o, w1a, b1, w2, b2, w3, b3 = params
    B, d_obs = obs.shape
    d_act = act.shape[1]
    L1 = w1o.shape[1]
    L2 = w2.shape[1]

    flops = 2 * B * (d_obs * L1 + d_act * L1 + L1 * L2 + L2)
    bytes_accessed = (
        sum(int(np.prod(p.shape)) * p.dtype.itemsize for p in params)
        + (obs.size + act.size + B) * 4
    )
    cost = pl.CostEstimate(flops=flops, transcendentals=0,
                           bytes_accessed=bytes_accessed)

    if B <= block_b:
        # Small batch: whole problem (~0.4 MiB of weights) is a single fully
        # resident block; no grid -> no per-step pipeline overhead.
        vmem = pl.BlockSpec(memory_space=pltpu.VMEM)
        smem = pl.BlockSpec(memory_space=pltpu.SMEM)
        return pl.pallas_call(
            _critic_kernel,
            out_shape=jax.ShapeDtypeStruct((B, 1), jnp.float32),
            in_specs=[vmem, vmem, vmem, vmem, vmem, vmem, vmem, vmem, smem],
            out_specs=vmem,
            cost_estimate=cost,
        )(obs, act, w1o, w1a, b1, w2, b2, w3, b3)

    # Training-sized batch: tile the batch over a parallel grid axis so both
    # TensorCores run on v7x; weights use constant block indices (stay resident
    # in VMEM, no re-DMA per step).
    if B % block_b != 0:
        pad = block_b - B % block_b
        obs = jnp.pad(obs, ((0, pad), (0, 0)))
        act = jnp.pad(act, ((0, pad), (0, 0)))
    Bp = obs.shape[0]

    row_map = lambda i: (i, 0)
    const2 = lambda i: (0, 0)
    out = pl.pallas_call(
        _critic_kernel,
        out_shape=jax.ShapeDtypeStruct((Bp, 1), jnp.float32),
        grid=(Bp // block_b,),
        in_specs=[
            pl.BlockSpec((block_b, d_obs), row_map),
            pl.BlockSpec((block_b, d_act), row_map),
            pl.BlockSpec((d_obs, L1), const2),
            pl.BlockSpec((d_act, L1), const2),
            pl.BlockSpec((1, L1), const2),
            pl.BlockSpec((L1, L2), const2),
            pl.BlockSpec((1, L2), const2),
            pl.BlockSpec((1, L2), const2),
            pl.BlockSpec((1,), lambda i: (0,), memory_space=pltpu.SMEM),
        ],
        out_specs=pl.BlockSpec((block_b, 1), row_map),
        compiler_params=pltpu.CompilerParams(
            dimension_semantics=("parallel",)),
        cost_estimate=cost,
    )(obs, act, w1o, w1a, b1, w2, b2, w3, b3)
    return out[:B]


def init_critic_params(key, obs_dim, act_dim, layer_1_dim=512, layer_2_dim=256):
    """PyTorch-style init (uniform +/- 1/sqrt(fan_in)), stored in kernel layout:

      W1 split into (obs_dim, L1) and (act_dim, L1) pieces (fused concat),
      W2 as (L1, L2) bfloat16 (dominant HBM traffic halved),
      W3 as a (1, L2) f32 row (head becomes a lane reduction),
      b3 as a (1,) f32 scalar held in SMEM.
    """
    d_in = obs_dim + act_dim

    def linear(k, fan_in, fan_out):
        kw, kb = jax.random.split(k)
        bound = 1.0 / np.sqrt(fan_in)
        w = jax.random.uniform(kw, (fan_in, fan_out), jnp.float32, -bound, bound)
        b = jax.random.uniform(kb, (1, fan_out), jnp.float32, -bound, bound)
        return w, b

    k1, k2, k3 = jax.random.split(key, 3)
    w1, b1 = linear(k1, d_in, layer_1_dim)
    w2, b2 = linear(k2, layer_1_dim, layer_2_dim)
    w3, b3 = linear(k3, layer_2_dim, 1)

    w1o, w1a = w1[:obs_dim], w1[obs_dim:]
    w2 = w2.astype(jnp.bfloat16)
    w3 = w3.reshape(1, layer_2_dim)
    b3 = b3.reshape(1)
    return (w1o, w1a, b1, w2, b2, w3, b3)


def critic_ref(obs, act, params):
    """Pure-JAX reference using identical math (incl. bf16 layer-2 weights)."""
    w1o, w1a, b1, w2, b2, w3, b3 = params
    h1 = jnp.maximum(obs @ w1o + act @ w1a + b1, 0.0)
    h2 = jnp.dot(h1.astype(jnp.bfloat16), w2, preferred_element_type=jnp.float32)
    h2 = jnp.maximum(h2 + b2, 0.0)
    return jnp.sum(h2 * w3, axis=-1, keepdims=True) + b3[0]


if __name__ == "__main__":
    obs_dim, act_dim = 16, 8

    key = jax.random.PRNGKey(0)
    key, k_obs, k_act = jax.random.split(key, 3)
    params = init_critic_params(key, obs_dim, act_dim)

    # --- small batch: single-block path (no grid) -----------------------------
    batch = 8
    obs = jax.random.normal(k_obs, (batch, obs_dim), jnp.float32)
    act = jax.random.normal(k_act, (batch, act_dim), jnp.float32)

    q = jax.block_until_ready(critic_forward(obs, act, params))
    q_ref = critic_ref(obs, act, params)
    np.testing.assert_allclose(np.asarray(q), np.asarray(q_ref),
                               rtol=1e-3, atol=1e-3)
    assert q.shape == (batch, 1)

    # --- training-sized batch: parallel batch grid (megacore path) ------------
    big = 256
    k_obs2, k_act2 = jax.random.split(jax.random.PRNGKey(1))
    obs_b = jax.random.normal(k_obs2, (big, obs_dim), jnp.float32)
    act_b = jax.random.normal(k_act2, (big, act_dim), jnp.float32)

    q_b = jax.block_until_ready(critic_forward(obs_b, act_b, params))
    q_b_ref = critic_ref(obs_b, act_b, params)
    np.testing.assert_allclose(np.asarray(q_b), np.asarray(q_b_ref),
                               rtol=1e-3, atol=1e-3)
    assert q_b.shape == (big, 1)

    print("KERNEL_OK")
</pallas_src>

<mosaic_0001>
module attributes {stable_mosaic.version = 11 : i64} {
  func.func @_critic_kernel(%arg0: memref<8x16xf32, #tpu.memory_space<vmem>>, %arg1: memref<8x8xf32, #tpu.memory_space<vmem>>, %arg2: memref<16x512xf32, #tpu.memory_space<vmem>>, %arg3: memref<8x512xf32, #tpu.memory_space<vmem>>, %arg4: memref<1x512xf32, #tpu.memory_space<vmem>>, %arg5: memref<512x256xbf16, #tpu.memory_space<vmem>>, %arg6: memref<1x256xf32, #tpu.memory_space<vmem>>, %arg7: memref<1x256xf32, #tpu.memory_space<vmem>>, %arg8: memref<1xf32, #tpu.memory_space<smem>>, %arg9: memref<8x1xf32, #tpu.memory_space<vmem>>) attributes {dimension_semantics = [], scalar_prefetch = 0 : i64, scratch_operands = 0 : i64, tpu.core_type = #tpu.core_type<tc>} {
    %c0 = arith.constant 0 : index
    %c0_0 = arith.constant 0 : index
    %0 = vector.load %arg0[%c0, %c0_0] : memref<8x16xf32, #tpu.memory_space<vmem>>, vector<8x16xf32>
    %c0_1 = arith.constant 0 : index
    %c0_2 = arith.constant 0 : index
    %1 = vector.load %arg2[%c0_1, %c0_2] : memref<16x512xf32, #tpu.memory_space<vmem>>, vector<16x512xf32>
    %cst = arith.constant dense<0.000000e+00> : vector<8x512xf32>
    %2 = tpu.matmul %0, %1, %cst {dimension_numbers = #tpu.dot_dimension_numbers<[1], [0], [0], [1], [0, 0, 1, 1], [], []>} : vector<8x16xf32>, vector<16x512xf32>, vector<8x512xf32> -> vector<8x512xf32>
    %c0_3 = arith.constant 0 : index
    %c0_4 = arith.constant 0 : index
    %3 = vector.load %arg1[%c0_3, %c0_4] : memref<8x8xf32, #tpu.memory_space<vmem>>, vector<8x8xf32>
    %c0_5 = arith.constant 0 : index
    %c0_6 = arith.constant 0 : index
    %4 = vector.load %arg3[%c0_5, %c0_6] : memref<8x512xf32, #tpu.memory_space<vmem>>, vector<8x512xf32>
    %cst_7 = arith.constant dense<0.000000e+00> : vector<8x512xf32>
    %5 = tpu.matmul %3, %4, %cst_7 {dimension_numbers = #tpu.dot_dimension_numbers<[1], [0], [0], [1], [0, 0, 1, 1], [], []>} : vector<8x8xf32>, vector<8x512xf32>, vector<8x512xf32> -> vector<8x512xf32>
    %6 = arith.addf %2, %5 : vector<8x512xf32>
    %c0_8 = arith.constant 0 : index
    %c0_9 = arith.constant 0 : index
    %7 = vector.load %arg4[%c0_8, %c0_9] : memref<1x512xf32, #tpu.memory_space<vmem>>, vector<1x512xf32>
    %8 = vector.broadcast %7 : vector<1x512xf32> to vector<8x512xf32>
    %9 = arith.addf %6, %8 : vector<8x512xf32>
    %cst_10 = arith.constant 0.000000e+00 : f32
    %10 = vector.broadcast %cst_10 : f32 to vector<8x512xf32>
    %11 = arith.maximumf %9, %10 : vector<8x512xf32>
    %12 = arith.truncf %11 : vector<8x512xf32> to vector<8x512xbf16>
    %c0_11 = arith.constant 0 : index
    %c0_12 = arith.constant 0 : index
    %13 = vector.load %arg5[%c0_11, %c0_12] : memref<512x256xbf16, #tpu.memory_space<vmem>>, vector<512x256xbf16>
    %cst_13 = arith.constant dense<0.000000e+00> : vector<8x256xf32>
    %14 = tpu.matmul %12, %13, %cst_13 {dimension_numbers = #tpu.dot_dimension_numbers<[1], [0], [0], [1], [0, 0, 1, 1], [], []>} : vector<8x512xbf16>, vector<512x256xbf16>, vector<8x256xf32> -> vector<8x256xf32>
    %c0_14 = arith.constant 0 : index
    %c0_15 = arith.constant 0 : index
    %15 = vector.load %arg6[%c0_14, %c0_15] : memref<1x256xf32, #tpu.memory_space<vmem>>, vector<1x256xf32>
    %16 = vector.broadcast %15 : vector<1x256xf32> to vector<8x256xf32>
    %17 = arith.addf %14, %16 : vector<8x256xf32>
    %cst_16 = arith.constant 0.000000e+00 : f32
    %18 = vector.broadcast %cst_16 : f32 to vector<8x256xf32>
    %19 = arith.maximumf %17, %18 : vector<8x256xf32>
    %c0_17 = arith.constant 0 : index
    %c0_18 = arith.constant 0 : index
    %20 = vector.load %arg7[%c0_17, %c0_18] : memref<1x256xf32, #tpu.memory_space<vmem>>, vector<1x256xf32>
    %21 = vector.broadcast %20 : vector<1x256xf32> to vector<8x256xf32>
    %22 = arith.mulf %19, %21 : vector<8x256xf32>
    %cst_19 = arith.constant dense<0.000000e+00> : vector<8xf32>
    %23 = vector.multi_reduction <add>, %22, %cst_19 [1] : vector<8x256xf32> to vector<8xf32>
    %24 = vector.shape_cast %23 : vector<8xf32> to vector<8x1xf32>
    %c0_20 = arith.constant 0 : index
    %25 = memref.load %arg8[%c0_20] : memref<1xf32, #tpu.memory_space<smem>>
    %26 = vector.broadcast %25 : f32 to vector<8x1xf32>
    %27 = arith.addf %24, %26 : vector<8x1xf32>
    %c0_21 = arith.constant 0 : index
    %c0_22 = arith.constant 0 : index
    %28 = vector.load %arg9[%c0_21, %c0_22] : memref<8x1xf32, #tpu.memory_space<vmem>>, vector<8x1xf32>
    tpu.vector_store %arg9[%c0_21, %c0_22], %27 {strides = array<i32>} : memref<8x1xf32, #tpu.memory_space<vmem>>, vector<8x1xf32>,
    return
  }
}

</mosaic_0001>

<llo_original>
// kernel: tpu_custom_call.1
$region0: #{tpu_custom_call.1}
  #allocation0 [shape = 'u32[]', space=smem, size = 0x4, offset = 0x4, fixed_abs, tag = 'smem constant byte address 0x4 - core index']
  #allocation1 [shape = 'u32[144,128]{1,0:T(1,128)}', space=vmem, size = 0x12000, scoped, tag = 'internal scratch']
  #allocation2 [shape = 'f32[1]{0:T(128)S(6)}', space=smem, size = 0x200, scoped, tag = 'scoped memory for tpu_custom_call.1']
  %s0 = inlined_call_operand.hbm [shape: f32[8,16], index: 0, kind: input, shape index: {}]
  %s1 = inlined_call_operand.hbm [shape: f32[8,8], index: 1, kind: input, shape index: {}]
  %s2 = inlined_call_operand.hbm [shape: f32[16,512], index: 2, kind: input, shape index: {}]
  %s3 = inlined_call_operand.hbm [shape: f32[8,512], index: 3, kind: input, shape index: {}]
  %s4 = inlined_call_operand.vmem [shape: f32[1,512], index: 4, kind: input, shape index: {}]
  %s5 = inlined_call_operand.hbm [shape: bf16[512,256], index: 5, kind: input, shape index: {}]
  %s6 = inlined_call_operand.vmem [shape: f32[1,256], index: 6, kind: input, shape index: {}]
  %s7 = inlined_call_operand.vmem [shape: f32[1,256], index: 7, kind: input, shape index: {}]
  %s8 = inlined_call_operand.<no memory space> [shape: f32[1], index: 8, kind: input, shape index: {}]
  %s9 = inlined_call_operand.vmem [shape: f32[8,1], index: 9, kind: output, shape index: {}]
  %s10 = sld [smem:[#allocation0]]
  $region66: #{tpu_custom_call.1} parent=0
    _
  %s12 = ssub.s32 1, %s10
  %s13 = scalar_select 0, %s12, %s10
  %14 = sst [smem:[#allocation2]] %s8
  $region1: #{tpu_custom_call.1} parent=0
    #allocation3 [shape = 'u8[4096]{0}', space=vmem, size = 0x1000, scoped, tag = 'input window, operand 0, single buffered']
    #allocation4 [shape = 's32[1]{0}', space=sflag, size = 0x4, scoped, tag = 'scoped memory for tpu_custom_call.1']
    #allocation5 [shape = 'u8[4096]{0}', space=vmem, size = 0x1000, scoped, tag = 'input window, operand 1, single buffered']
    #allocation6 [shape = 's32[1]{0}', space=sflag, size = 0x4, scoped, tag = 'scoped memory for tpu_custom_call.1']
    #allocation7 [shape = 'u8[32768]{0}', space=vmem, size = 0x8000, scoped, tag = 'input window, operand 2, single buffered']
    #allocation8 [shape = 'u8[16384]{0}', space=vmem, size = 0x4000, scoped, tag = 'input window, operand 3, single buffered']
    #allocation9 [shape = 's32[1]{0}', space=sflag, size = 0x4, scoped, tag = 'scoped memory for tpu_custom_call.1']
    #allocation10 [shape = 'u8[262144]{0}', space=vmem, size = 0x40000, scoped, tag = 'input window, operand 5, single buffered']
    %15 = vsyncpa [#allocation4], 0
    %16 = vsyncpa [#allocation6], 0
    %17 = vsyncpa [#allocation9], 0
    // Predicated region
    $region2: #{tpu_custom_call.1} parent=1 // pred_check
      _
    $region3: #{tpu_custom_call.1} parent=1 // pred_check_branch
      %19 = sbr.rel (0) target = $region5
    $region4: #{tpu_custom_call.1} parent=1 // pred_region
      %s21 = ssub.s32 128, 128
      %22 = vsyncadd [#allocation4], %s21
      %s24 = sshll.u32 [#allocation3], 4
      %s25 = int_to_ptr.vmem [resolvable:$true] %s24
      %27 = dma.hbm_to_vmem [thread:$0]  %s0, 128, %s25, [#allocation4]
    $region5: #{tpu_custom_call.1} parent=1 // pred_fallthru
      _
    // Predicated region
    $region6: #{tpu_custom_call.1} parent=1 // pred_check
      _
    $region7: #{tpu_custom_call.1} parent=1 // pred_check_branch
      %29 = sbr.rel (0) target = $region9
    $region8: #{tpu_custom_call.1} parent=1 // pred_region
      %s31 = ssub.s32 128, 128
      %32 = vsyncadd [#allocation6], %s31
      %s34 = sshll.u32 [#allocation5], 4
      %s35 = int_to_ptr.vmem [resolvable:$true] %s34
      %37 = dma.hbm_to_vmem [thread:$0]  %s1, 128, %s35, [#allocation6]
    $region9: #{tpu_custom_call.1} parent=1 // pred_fallthru
      _
    // Predicated region
    $region10: #{tpu_custom_call.1} parent=1 // pred_check
      _
    $region11: #{tpu_custom_call.1} parent=1 // pred_check_branch
      %39 = sbr.rel (0) target = $region13
    $region12: #{tpu_custom_call.1} parent=1 // pred_region
      %s41 = ssub.s32 1024, 1024
      %42 = vsyncadd [#allocation6], %s41
      %s43 = sshll.u32 [#allocation7], 4
      %s44 = int_to_ptr.vmem [resolvable:$true] %s43
      %49 = dma.hbm_to_vmem [thread:$0]  %s2, 1024, %s44, [#allocation6], 512, 512, 32
    $region13: #{tpu_custom_call.1} parent=1 // pred_fallthru
      _
    // Predicated region
    $region14: #{tpu_custom_call.1} parent=1 // pred_check
      _
    $region15: #{tpu_custom_call.1} parent=1 // pred_check_branch
      %51 = sbr.rel (0) target = $region17
    $region16: #{tpu_custom_call.1} parent=1 // pred_region
      %s53 = ssub.s32 512, 512
      %54 = vsyncadd [#allocation9], %s53
      %s56 = sshll.u32 [#allocation8], 4
      %s57 = int_to_ptr.vmem [resolvable:$true] %s56
      %59 = dma.hbm_to_vmem [thread:$0]  %s3, 512, %s57, [#allocation9]
    $region17: #{tpu_custom_call.1} parent=1 // pred_fallthru
      _
    // Predicated region
    $region18: #{tpu_custom_call.1} parent=1 // pred_check
      _
    $region19: #{tpu_custom_call.1} parent=1 // pred_check_branch
      %61 = sbr.rel (0) target = $region21
    $region20: #{tpu_custom_call.1} parent=1 // pred_region
      _
    $region21: #{tpu_custom_call.1} parent=1 // pred_fallthru
      _
    // Predicated region
    $region22: #{tpu_custom_call.1} parent=1 // pred_check
      _
    $region23: #{tpu_custom_call.1} parent=1 // pred_check_branch
      %63 = sbr.rel (0) target = $region25
    $region24: #{tpu_custom_call.1} parent=1 // pred_region
      %s65 = ssub.s32 8192, 8192
      %66 = vsyncadd [#allocation9], %s65
      %s67 = sshll.u32 [#allocation10], 4
      %s68 = int_to_ptr.vmem [resolvable:$true] %s67
      %73 = dma.hbm_to_vmem [thread:$0]  %s5, 8192, %s68, [#allocation9], 128, 128, 8
    $region25: #{tpu_custom_call.1} parent=1 // pred_fallthru
      _
    // Predicated region
    $region26: #{tpu_custom_call.1} parent=1 // pred_check
      _
    $region27: #{tpu_custom_call.1} parent=1 // pred_check_branch
      %75 = sbr.rel (0) target = $region29
    $region28: #{tpu_custom_call.1} parent=1 // pred_region
      _
    $region29: #{tpu_custom_call.1} parent=1 // pred_fallthru
      _
    // Predicated region
    $region30: #{tpu_custom_call.1} parent=1 // pred_check
      _
    $region31: #{tpu_custom_call.1} parent=1 // pred_check_branch
      %77 = sbr.rel (0) target = $region33
    $region32: #{tpu_custom_call.1} parent=1 // pred_region
      _
    $region33: #{tpu_custom_call.1} parent=1 // pred_fallthru
      _
    // Predicated region
    $region34: #{tpu_custom_call.1} parent=1 // pred_check
      _
    $region35: #{tpu_custom_call.1} parent=1 // pred_check_branch
      %79 = sbr.rel (0) target = $region37
    $region36: #{tpu_custom_call.1} parent=1 // pred_region
      _
    $region37: #{tpu_custom_call.1} parent=1 // pred_fallthru
      _
    // Predicated region
    $region38: #{tpu_custom_call.1} parent=1 // pred_check
      _
    $region39: #{tpu_custom_call.1} parent=1 // pred_check_branch
      %81 = sbr.rel (0) target = $region41
    $region40: #{tpu_custom_call.1} parent=1 // pred_region
      %82 = dma.done [#allocation4], 128
    $region41: #{tpu_custom_call.1} parent=1 // pred_fallthru
      _
    // Predicated region
    $region42: #{tpu_custom_call.1} parent=1 // pred_check
      _
    $region43: #{tpu_custom_call.1} parent=1 // pred_check_branch
      %84 = sbr.rel (0) target = $region45
    $region44: #{tpu_custom_call.1} parent=1 // pred_region
      %85 = dma.done [#allocation6], 128
    $region45: #{tpu_custom_call.1} parent=1 // pred_fallthru
      _
    // Predicated region
    $region46: #{tpu_custom_call.1} parent=1 // pred_check
      _
    $region47: #{tpu_custom_call.1} parent=1 // pred_check_branch
      %87 = sbr.rel (0) target = $region49
    $region48: #{tpu_custom_call.1} parent=1 // pred_region
      %88 = dma.done [#allocation6], 1024
    $region49: #{tpu_custom_call.1} parent=1 // pred_fallthru
      _
    // Predicated region
    $region50: #{tpu_custom_call.1} parent=1 // pred_check
      _
    $region51: #{tpu_custom_call.1} parent=1 // pred_check_branch
      %90 = sbr.rel (0) target = $region53
    $region52: #{tpu_custom_call.1} parent=1 // pred_region
      %91 = dma.done [#allocation9], 512
    $region53: #{tpu_custom_call.1} parent=1 // pred_fallthru
      _
    // Predicated region
    $region54: #{tpu_custom_call.1} parent=1 // pred_check
      _
    $region55: #{tpu_custom_call.1} parent=1 // pred_check_branch
      %93 = sbr.rel (0) target = $region57
    $region56: #{tpu_custom_call.1} parent=1 // pred_region
      %94 = dma.done [#allocation9], 8192
    $region57: #{tpu_custom_call.1} parent=1 // pred_fallthru
      _
    %v95 = vld [vmem:[#allocation3] sm:$0xff]
    %v96 = vld [vmem:[#allocation7] sm:$0xff]
    %v97 = vld [vmem:[#allocation7 + $0x8] sm:$0xff]
    %v98 = vld [vmem:[#allocation7 + $0x10] sm:$0xff]
    %v99 = vld [vmem:[#allocation7 + $0x18] sm:$0xff]
    %v100 = vld [vmem:[#allocation7 + $0x20] sm:$0xff]
    %v101 = vld [vmem:[#allocation7 + $0x28] sm:$0xff]
    %v102 = vld [vmem:[#allocation7 + $0x30] sm:$0xff]
    %v103 = vld [vmem:[#allocation7 + $0x38] sm:$0xff]
    %v104 = vld [vmem:[#allocation5] sm:$0xff]
    %v105 = vld [vmem:[#allocation8] sm:$0xff]
    %v106 = vld [vmem:[#allocation8 + $0x8] sm:$0xff]
    %v107 = vld [vmem:[#allocation8 + $0x10] sm:$0xff]
    %v108 = vld [vmem:[#allocation8 + $0x18] sm:$0xff]
    %vm109 = vcmask 64512
    %v111 = vsel %vm109, %v104, 0
    %113 = vmatprep.subr.mxu0 %v106
    %114 = vmatpush1.msra.mxu0 %v105
    %115 = vmatprep.subr.mxu0 0.0
    %116 = vmatpush1.msra.mxu0 0.0
    %117 = vmatprep.subr.mxu0 0.0
    %118 = vmatpush1.msra.mxu0 0.0
    %119 = vmatprep.subr.mxu0 0.0
    %120 = vmatpush1.msra.mxu0 0.0
    %121 = vmatprep.subr.mxu0 0.0
    %122 = vmatpush1.msra.mxu0 0.0
    %123 = vmatprep.subr.mxu0 0.0
    %124 = vmatpush1.msra.mxu0 0.0
    %125 = vmatprep.subr.mxu0 0.0
    %126 = vmatpush1.msra.mxu0 0.0
    %127 = vmatprep.subr.mxu0 0.0
    %128 = vmatpush1.msra.mxu0 0.0
    %129 = vmatprep.subr.mxu0 0.0
    %130 = vmatpush1.msra.mxu0 0.0
    %131 = vmatprep.subr.mxu0 0.0
    %132 = vmatpush1.msra.mxu0 0.0
    %133 = vmatprep.subr.mxu0 0.0
    %134 = vmatpush1.msra.mxu0 0.0
    %135 = vmatprep.subr.mxu0 0.0
    %136 = vmatpush1.msra.mxu0 0.0
    %137 = vmatprep.subr.mxu0 0.0
    %138 = vmatpush1.msra.mxu0 0.0
    %139 = vmatprep.subr.mxu0 0.0
    %140 = vmatpush1.msra.mxu0 0.0
    %141 = vmatprep.subr.mxu0 0.0
    %142 = vmatpush1.msra.mxu0 0.0
    %143 = vmatprep.subr.mxu0 0.0
    %144 = vmatpush1.msra.mxu0 0.0
    %145 = vmatprep.subr.mxu0 0.0
    %146 = vmatpush1.msra.mxu0 0.0
    %147 = vmatprep.subr.mxu0 0.0
    %148 = vmatpush1.msra.mxu0 0.0
    %149 = vmatprep.subr.mxu0 0.0
    %150 = vmatpush1.msra.mxu0 0.0
    %151 = vmatprep.subr.mxu0 0.0
    %152 = vmatpush1.msra.mxu0 0.0
    %153 = vmatprep.subr.mxu0 0.0
    %154 = vmatpush1.msra.mxu0 0.0
    %155 = vmatprep.subr.mxu0 0.0
    %156 = vmatpush1.msra.mxu0 0.0
    %157 = vmatprep.subr.mxu0 0.0
    %158 = vmatpush1.msra.mxu0 0.0
    %159 = vmatprep.subr.mxu0 0.0
    %160 = vmatpush1.msra.mxu0 0.0
    %161 = vmatprep.subr.mxu0 0.0
    %162 = vmatpush1.msra.mxu0 0.0
    %163 = vmatprep.subr.mxu0 0.0
    %164 = vmatpush1.msra.mxu0 0.0
    %165 = vmatprep.subr.mxu0 0.0
    %166 = vmatpush1.msra.mxu0 0.0
    %167 = vmatprep.subr.mxu0 0.0
    %168 = vmatpush1.msra.mxu0 0.0
    %169 = vmatprep.subr.mxu0 0.0
    %170 = vmatpush1.msra.mxu0 0.0
    %171 = vmatprep.subr.mxu0 0.0
    %172 = vmatpush1.msra.mxu0 0.0
    %173 = vmatprep.subr.mxu0 0.0
    %174 = vmatpush1.msra.mxu0 0.0
    %175 = vmatprep.subr.mxu0 0.0
    %176 = vmatpush1.msra.mxu0 0.0
    %177 = vmatprep.mubr.f32.mxu0 0.0
    %178 = vmatmul.mubr.f32.gmra.mrb[0].mxu0 %v111
    %v179 = vpop.f32.mrb[0].mxu0
    %v180 = vadd.f32 0.0, %v179
    %v181 = vpop.f32.mrb[0].mxu0
    %v182 = vadd.f32 0.0, %v181
    %183 = vdwg.mxu0
    %184 = vmatprep.subr.mxu0 %v108
    %185 = vmatpush1.msra.mxu0 %v107
    %186 = vmatprep.subr.mxu0 0.0
    %187 = vmatpush1.msra.mxu0 0.0
    %188 = vmatprep.subr.mxu0 0.0
    %189 = vmatpush1.msra.mxu0 0.0
    %190 = vmatprep.subr.mxu0 0.0
    %191 = vmatpush1.msra.mxu0 0.0
    %192 = vmatprep.subr.mxu0 0.0
    %193 = vmatpush1.msra.mxu0 0.0
    %194 = vmatprep.subr.mxu0 0.0
    %195 = vmatpush1.msra.mxu0 0.0
    %196 = vmatprep.subr.mxu0 0.0
    %197 = vmatpush1.msra.mxu0 0.0
    %198 = vmatprep.subr.mxu0 0.0
    %199 = vmatpush1.msra.mxu0 0.0
    %200 = vmatprep.subr.mxu0 0.0
    %201 = vmatpush1.msra.mxu0 0.0
    %202 = vmatprep.subr.mxu0 0.0
    %203 = vmatpush1.msra.mxu0 0.0
    %204 = vmatprep.subr.mxu0 0.0
    %205 = vmatpush1.msra.mxu0 0.0
    %206 = vmatprep.subr.mxu0 0.0
    %207 = vmatpush1.msra.mxu0 0.0
    %208 = vmatprep.subr.mxu0 0.0
    %209 = vmatpush1.msra.mxu0 0.0
    %210 = vmatprep.subr.mxu0 0.0
    %211 = vmatpush1.msra.mxu0 0.0
    %212 = vmatprep.subr.mxu0 0.0
    %213 = vmatpush1.msra.mxu0 0.0
    %214 = vmatprep.subr.mxu0 0.0
    %215 = vmatpush1.msra.mxu0 0.0
    %216 = vmatprep.subr.mxu0 0.0
    %217 = vmatpush1.msra.mxu0 0.0
    %218 = vmatprep.subr.mxu0 0.0
    %219 = vmatpush1.msra.mxu0 0.0
    %220 = vmatprep.subr.mxu0 0.0
    %221 = vmatpush1.msra.mxu0 0.0
    %222 = vmatprep.subr.mxu0 0.0
    %223 = vmatpush1.msra.mxu0 0.0
    %224 = vmatprep.subr.mxu0 0.0
    %225 = vmatpush1.msra.mxu0 0.0
    %226 = vmatprep.subr.mxu0 0.0
    %227 = vmatpush1.msra.mxu0 0.0
    %228 = vmatprep.subr.mxu0 0.0
    %229 = vmatpush1.msra.mxu0 0.0
    %230 = vmatprep.subr.mxu0 0.0
    %231 = vmatpush1.msra.mxu0 0.0
    %232 = vmatprep.subr.mxu0 0.0
    %233 = vmatpush1.msra.mxu0 0.0
    %234 = vmatprep.subr.mxu0 0.0
    %235 = vmatpush1.msra.mxu0 0.0
    %236 = vmatprep.subr.mxu0 0.0
    %237 = vmatpush1.msra.mxu0 0.0
    %238 = vmatprep.subr.mxu0 0.0
    %239 = vmatpush1.msra.mxu0 0.0
    %240 = vmatprep.subr.mxu0 0.0
    %241 = vmatpush1.msra.mxu0 0.0
    %242 = vmatprep.subr.mxu0 0.0
    %243 = vmatpush1.msra.mxu0 0.0
    %244 = vmatprep.subr.mxu0 0.0
    %245 = vmatpush1.msra.mxu0 0.0
    %246 = vmatprep.subr.mxu0 0.0
    %247 = vmatpush1.msra.mxu0 0.0
    %248 = vmatprep.mubr.f32.mxu0 0.0
    %249 = vmatmul.mubr.f32.gmra.mrb[0].mxu0 %v111
    %v250 = vpop.f32.mrb[0].mxu0
    %v251 = vadd.f32 0.0, %v250
    %v252 = vpop.f32.mrb[0].mxu0
    %v253 = vadd.f32 0.0, %v252
    %254 = vdwg.mxu0
    %vm255 = vcmask 130048
    %v257 = vsel %vm255, %v95, 0
    %259 = vmatprep.subr.mxu0 %v97
    %260 = vmatpush1.msra.mxu0 %v96
    %261 = vmatprep.subr.mxu0 %v101
    %262 = vmatpush1.msra.mxu0 %v100
    %263 = vmatprep.subr.mxu0 0.0
    %264 = vmatpush1.msra.mxu0 0.0
    %265 = vmatprep.subr.mxu0 0.0
    %266 = vmatpush1.msra.mxu0 0.0
    %267 = vmatprep.subr.mxu0 0.0
    %268 = vmatpush1.msra.mxu0 0.0
    %269 = vmatprep.subr.mxu0 0.0
    %270 = vmatpush1.msra.mxu0 0.0
    %271 = vmatprep.subr.mxu0 0.0
    %272 = vmatpush1.msra.mxu0 0.0
    %273 = vmatprep.subr.mxu0 0.0
    %274 = vmatpush1.msra.mxu0 0.0
    %275 = vmatprep.subr.mxu0 0.0
    %276 = vmatpush1.msra.mxu0 0.0
    %277 = vmatprep.subr.mxu0 0.0
    %278 = vmatpush1.msra.mxu0 0.0
    %279 = vmatprep.subr.mxu0 0.0
    %280 = vmatpush1.msra.mxu0 0.0
    %281 = vmatprep.subr.mxu0 0.0
    %282 = vmatpush1.msra.mxu0 0.0
    %283 = vmatprep.subr.mxu0 0.0
    %284 = vmatpush1.msra.mxu0 0.0
    %285 = vmatprep.subr.mxu0 0.0
    %286 = vmatpush1.msra.mxu0 0.0
    %287 = vmatprep.subr.mxu0 0.0
    %288 = vmatpush1.msra.mxu0 0.0
    %289 = vmatprep.subr.mxu0 0.0
    %290 = vmatpush1.msra.mxu0 0.0
    %291 = vmatprep.subr.mxu0 0.0
    %292 = vmatpush1.msra.mxu0 0.0
    %293 = vmatprep.subr.mxu0 0.0
    %294 = vmatpush1.msra.mxu0 0.0
    %295 = vmatprep.subr.mxu0 0.0
    %296 = vmatpush1.msra.mxu0 0.0
    %297 = vmatprep.subr.mxu0 0.0
    %298 = vmatpush1.msra.mxu0 0.0
    %299 = vmatprep.subr.mxu0 0.0
    %300 = vmatpush1.msra.mxu0 0.0
    %301 = vmatprep.subr.mxu0 0.0
    %302 = vmatpush1.msra.mxu0 0.0
    %303 = vmatprep.subr.mxu0 0.0
    %304 = vmatpush1.msra.mxu0 0.0
    %305 = vmatprep.subr.mxu0 0.0
    %306 = vmatpush1.msra.mxu0 0.0
    %307 = vmatprep.subr.mxu0 0.0
    %308 = vmatpush1.msra.mxu0 0.0
    %309 = vmatprep.subr.mxu0 0.0
    %310 = vmatpush1.msra.mxu0 0.0
    %311 = vmatprep.subr.mxu0 0.0
    %312 = vmatpush1.msra.mxu0 0.0
    %313 = vmatprep.subr.mxu0 0.0
    %314 = vmatpush1.msra.mxu0 0.0
    %315 = vmatprep.subr.mxu0 0.0
    %316 = vmatpush1.msra.mxu0 0.0
    %317 = vmatprep.subr.mxu0 0.0
    %318 = vmatpush1.msra.mxu0 0.0
    %319 = vmatprep.subr.mxu0 0.0
    %320 = vmatpush1.msra.mxu0 0.0
    %321 = vmatprep.subr.mxu0 0.0
    %322 = vmatpush1.msra.mxu0 0.0
    %323 = vmatprep.mubr.f32.mxu0 0.0
    %324 = vmatmul.mubr.f32.gmra.mrb[0].mxu0 %v257
    %v325 = vpop.f32.mrb[0].mxu0
    %v326 = vadd.f32 %v180, %v325
    %v327 = vpop.f32.mrb[0].mxu0
    %v328 = vadd.f32 %v182, %v327
    %329 = vdwg.mxu0
    %330 = vmatprep.subr.mxu0 %v99
    %331 = vmatpush1.msra.mxu0 %v98
    %332 = vmatprep.subr.mxu0 %v103
    %333 = vmatpush1.msra.mxu0 %v102
    %334 = vmatprep.subr.mxu0 0.0
    %335 = vmatpush1.msra.mxu0 0.0
    %336 = vmatprep.subr.mxu0 0.0
    %337 = vmatpush1.msra.mxu0 0.0
    %338 = vmatprep.subr.mxu0 0.0
    %339 = vmatpush1.msra.mxu0 0.0
    %340 = vmatprep.subr.mxu0 0.0
    %341 = vmatpush1.msra.mxu0 0.0
    %342 = vmatprep.subr.mxu0 0.0
    %343 = vmatpush1.msra.mxu0 0.0
    %344 = vmatprep.subr.mxu0 0.0
    %345 = vmatpush1.msra.mxu0 0.0
    %346 = vmatprep.subr.mxu0 0.0
    %347 = vmatpush1.msra.mxu0 0.0
    %348 = vmatprep.subr.mxu0 0.0
    %349 = vmatpush1.msra.mxu0 0.0
    %350 = vmatprep.subr.mxu0 0.0
    %351 = vmatpush1.msra.mxu0 0.0
    %352 = vmatprep.subr.mxu0 0.0
    %353 = vmatpush1.msra.mxu0 0.0
    %354 = vmatprep.subr.mxu0 0.0
    %355 = vmatpush1.msra.mxu0 0.0
    %356 = vmatprep.subr.mxu0 0.0
    %357 = vmatpush1.msra.mxu0 0.0
    %358 = vmatprep.subr.mxu0 0.0
    %359 = vmatpush1.msra.mxu0 0.0
    %360 = vmatprep.subr.mxu0 0.0
    %361 = vmatpush1.msra.mxu0 0.0
    %362 = vmatprep.subr.mxu0 0.0
    %363 = vmatpush1.msra.mxu0 0.0
    %364 = vmatprep.subr.mxu0 0.0
    %365 = vmatpush1.msra.mxu0 0.0
    %366 = vmatprep.subr.mxu0 0.0
    %367 = vmatpush1.msra.mxu0 0.0
    %368 = vmatprep.subr.mxu0 0.0
    %369 = vmatpush1.msra.mxu0 0.0
    %370 = vmatprep.subr.mxu0 0.0
    %371 = vmatpush1.msra.mxu0 0.0
    %372 = vmatprep.subr.mxu0 0.0
    %373 = vmatpush1.msra.mxu0 0.0
    %374 = vmatprep.subr.mxu0 0.0
    %375 = vmatpush1.msra.mxu0 0.0
    %376 = vmatprep.subr.mxu0 0.0
    %377 = vmatpush1.msra.mxu0 0.0
    %378 = vmatprep.subr.mxu0 0.0
    %379 = vmatpush1.msra.mxu0 0.0
    %380 = vmatprep.subr.mxu0 0.0
    %381 = vmatpush1.msra.mxu0 0.0
    %382 = vmatprep.subr.mxu0 0.0
    %383 = vmatpush1.msra.mxu0 0.0
    %384 = vmatprep.subr.mxu0 0.0
    %385 = vmatpush1.msra.mxu0 0.0
    %386 = vmatprep.subr.mxu0 0.0
    %387 = vmatpush1.msra.mxu0 0.0
    %388 = vmatprep.subr.mxu0 0.0
    %389 = vmatpush1.msra.mxu0 0.0
    %390 = vmatprep.subr.mxu0 0.0
    %391 = vmatpush1.msra.mxu0 0.0
    %392 = vmatprep.subr.mxu0 0.0
    %393 = vmatpush1.msra.mxu0 0.0
    %394 = vmatprep.mubr.f32.mxu0 0.0
    %395 = vmatmul.mubr.f32.gmra.mrb[0].mxu0 %v257
    %v396 = vpop.f32.mrb[0].mxu0
    %v397 = vadd.f32 %v251, %v396
    %v398 = vpop.f32.mrb[0].mxu0
    %v399 = vadd.f32 %v253, %v398
    %400 = vdwg.mxu0
    %v401 = vld [vmem:[%s4] sm:$0xf]
    %v403 = vlaneseq
    %v404 = vshrl.u32 %v403, 7
    %v405 = vsub.s32 0, %v404
    %v406 = vrot.slane %v401, %v405
    %v407 = vlaneseq
    %v408 = vshrl.u32 %v407, 7
    %v409 = vsub.s32 1, %v408
    %v410 = vrot.slane %v401, %v409
    %v411 = vlaneseq
    %v412 = vshrl.u32 %v411, 7
    %v413 = vsub.s32 2, %v412
    %v414 = vrot.slane %v401, %v413
    %v415 = vlaneseq
    %v416 = vshrl.u32 %v415, 7
    %v417 = vsub.s32 3, %v416
    %v418 = vrot.slane %v401, %v417
    %v423 = vadd.f32 %v326, %v406
    %v424 = vadd.f32 %v328, %v410
    %v425 = vadd.f32 %v397, %v414
    %v426 = vadd.f32 %v399, %v418
    %v427 = vmax.f32 %v423, 0.0
    %v428 = vmax.f32 %v424, 0.0
    %v429 = vmax.f32 %v425, 0.0
    %v430 = vmax.f32 %v426, 0.0
    %v431 = vpack.c.bf16 %v427, %v427
    %v432 = vpack.c.bf16 %v428, %v428
    %v433 = vpack.c.bf16 %v429, %v429
    %v434 = vpack.c.bf16 %v430, %v430
    %v435 = vld [vmem:[#allocation10] sm:$0xff]
    %v436 = vld [vmem:[#allocation10 + $0x8] sm:$0xff]
    %v437 = vld [vmem:[#allocation10 + $0x10] sm:$0xff]
    %v438 = vld [vmem:[#allocation10 + $0x18] sm:$0xff]
    %v439 = vld [vmem:[#allocation10 + $0x20] sm:$0xff]
    %v440 = vld [vmem:[#allocation10 + $0x28] sm:$0xff]
    %v441 = vld [vmem:[#allocation10 + $0x30] sm:$0xff]
    %v442 = vld [vmem:[#allocation10 + $0x38] sm:$0xff]
    %v443 = vld [vmem:[#allocation10 + $0x40] sm:$0xff]
    %v444 = vld [vmem:[#allocation10 + $0x48] sm:$0xff]
    %v445 = vld [vmem:[#allocation10 + $0x50] sm:$0xff]
    %v446 = vld [vmem:[#allocation10 + $0x58] sm:$0xff]
    %v447 = vld [vmem:[#allocation10 + $0x60] sm:$0xff]
    %v448 = vld [vmem:[#allocation10 + $0x68] sm:$0xff]
    %v449 = vld [vmem:[#allocation10 + $0x70] sm:$0xff]
    %v450 = vld [vmem:[#allocation10 + $0x78] sm:$0xff]
    %v451 = vld [vmem:[#allocation10 + $0x80] sm:$0xff]
    %v452 = vld [vmem:[#allocation10 + $0x88] sm:$0xff]
    %v453 = vld [vmem:[#allocation10 + $0x90] sm:$0xff]
    %v454 = vld [vmem:[#allocation10 + $0x98] sm:$0xff]
    %v455 = vld [vmem:[#allocation10 + $0xa0] sm:$0xff]
    %v456 = vld [vmem:[#allocation10 + $0xa8] sm:$0xff]
    %v457 = vld [vmem:[#allocation10 + $0xb0] sm:$0xff]
    %v458 = vld [vmem:[#allocation10 + $0xb8] sm:$0xff]
    %v459 = vld [vmem:[#allocation10 + $0xc0] sm:$0xff]
    %v460 = vld [vmem:[#allocation10 + $0xc8] sm:$0xff]
    %v461 = vld [vmem:[#allocation10 + $0xd0] sm:$0xff]
    %v462 = vld [vmem:[#allocation10 + $0xd8] sm:$0xff]
    %v463 = vld [vmem:[#allocation10 + $0xe0] sm:$0xff]
    %v464 = vld [vmem:[#allocation10 + $0xe8] sm:$0xff]
    %v465 = vld [vmem:[#allocation10 + $0xf0] sm:$0xff]
    %v466 = vld [vmem:[#allocation10 + $0xf8] sm:$0xff]
    %v467 = vld [vmem:[#allocation10 + $0x100] sm:$0xff]
    %v468 = vld [vmem:[#allocation10 + $0x108] sm:$0xff]
    %v469 = vld [vmem:[#allocation10 + $0x110] sm:$0xff]
    %v470 = vld [vmem:[#allocation10 + $0x118] sm:$0xff]
    %v471 = vld [vmem:[#allocation10 + $0x120] sm:$0xff]
    %v472 = vld [vmem:[#allocation10 + $0x128] sm:$0xff]
    %v473 = vld [vmem:[#allocation10 + $0x130] sm:$0xff]
    %v474 = vld [vmem:[#allocation10 + $0x138] sm:$0xff]
    %v475 = vld [vmem:[#allocation10 + $0x140] sm:$0xff]
    %v476 = vld [vmem:[#allocation10 + $0x148] sm:$0xff]
    %v477 = vld [vmem:[#allocation10 + $0x150] sm:$0xff]
    %v478 = vld [vmem:[#allocation10 + $0x158] sm:$0xff]
    %v479 = vld [vmem:[#allocation10 + $0x160] sm:$0xff]
    %v480 = vld [vmem:[#allocation10 + $0x168] sm:$0xff]
    %v481 = vld [vmem:[#allocation10 + $0x170] sm:$0xff]
    %v482 = vld [vmem:[#allocation10 + $0x178] sm:$0xff]
    %v483 = vld [vmem:[#allocation10 + $0x180] sm:$0xff]
    %v484 = vld [vmem:[#allocation10 + $0x188] sm:$0xff]
    %v485 = vld [vmem:[#allocation10 + $0x190] sm:$0xff]
    %v486 = vld [vmem:[#allocation10 + $0x198] sm:$0xff]
    %v487 = vld [vmem:[#allocation10 + $0x1a0] sm:$0xff]
    %v488 = vld [vmem:[#allocation10 + $0x1a8] sm:$0xff]
    %v489 = vld [vmem:[#allocation10 + $0x1b0] sm:$0xff]
    %v490 = vld [vmem:[#allocation10 + $0x1b8] sm:$0xff]
    %v491 = vld [vmem:[#allocation10 + $0x1c0] sm:$0xff]
    %v492 = vld [vmem:[#allocation10 + $0x1c8] sm:$0xff]
    %v493 = vld [vmem:[#allocation10 + $0x1d0] sm:$0xff]
    %v494 = vld [vmem:[#allocation10 + $0x1d8] sm:$0xff]
    %v495 = vld [vmem:[#allocation10 + $0x1e0] sm:$0xff]
    %v496 = vld [vmem:[#allocation10 + $0x1e8] sm:$0xff]
    %v497 = vld [vmem:[#allocation10 + $0x1f0] sm:$0xff]
    %v498 = vld [vmem:[#allocation10 + $0x1f8] sm:$0xff]
    %v499 = vld [vmem:[%s6] sm:$0x3]
    %v501 = vlaneseq
    %v502 = vshrl.u32 %v501, 7
    %v503 = vsub.s32 0, %v502
    %v504 = vrot.slane %v499, %v503
    %v505 = vlaneseq
    %v506 = vshrl.u32 %v505, 7
    %v507 = vsub.s32 1, %v506
    %v508 = vrot.slane %v499, %v507
    %v575 = vunpack.c.l.b16 %v435
    %v576 = vunpack.c.h.b16 %v435
    %v577 = vunpack.c.l.b16 %v436
    %v578 = vunpack.c.h.b16 %v436
    %v579 = vunpack.c.l.b16 %v437
    %v580 = vunpack.c.h.b16 %v437
    %v581 = vunpack.c.l.b16 %v438
    %v582 = vunpack.c.h.b16 %v438
    %v583 = vunpack.c.l.b16 %v439
    %v584 = vunpack.c.h.b16 %v439
    %v585 = vunpack.c.l.b16 %v440
    %v586 = vunpack.c.h.b16 %v440
    %v587 = vunpack.c.l.b16 %v441
    %v588 = vunpack.c.h.b16 %v441
    %v589 = vunpack.c.l.b16 %v442
    %v590 = vunpack.c.h.b16 %v442
    %v591 = vunpack.c.l.b16 %v443
    %v592 = vunpack.c.h.b16 %v443
    %v593 = vunpack.c.l.b16 %v444
    %v594 = vunpack.c.h.b16 %v444
    %v595 = vunpack.c.l.b16 %v445
    %v596 = vunpack.c.h.b16 %v445
    %v597 = vunpack.c.l.b16 %v446
    %v598 = vunpack.c.h.b16 %v446
    %v599 = vunpack.c.l.b16 %v447
    %v600 = vunpack.c.h.b16 %v447
    %v601 = vunpack.c.l.b16 %v448
    %v602 = vunpack.c.h.b16 %v448
    %v603 = vunpack.c.l.b16 %v449
    %v604 = vunpack.c.h.b16 %v449
    %v605 = vunpack.c.l.b16 %v450
    %v606 = vunpack.c.h.b16 %v450
    %v607 = vunpack.c.l.b16 %v451
    %v608 = vunpack.c.h.b16 %v451
    %v609 = vunpack.c.l.b16 %v452
    %v610 = vunpack.c.h.b16 %v452
    %v611 = vunpack.c.l.b16 %v453
    %v612 = vunpack.c.h.b16 %v453
    %v613 = vunpack.c.l.b16 %v454
    %v614 = vunpack.c.h.b16 %v454
    %v615 = vunpack.c.l.b16 %v455
    %v616 = vunpack.c.h.b16 %v455
    %v617 = vunpack.c.l.b16 %v456
    %v618 = vunpack.c.h.b16 %v456
    %v619 = vunpack.c.l.b16 %v457
    %v620 = vunpack.c.h.b16 %v457
    %v621 = vunpack.c.l.b16 %v458
    %v622 = vunpack.c.h.b16 %v458
    %v623 = vunpack.c.l.b16 %v459
    %v624 = vunpack.c.h.b16 %v459
    %v625 = vunpack.c.l.b16 %v460
    %v626 = vunpack.c.h.b16 %v460
    %v627 = vunpack.c.l.b16 %v461
    %v628 = vunpack.c.h.b16 %v461
    %v629 = vunpack.c.l.b16 %v462
    %v630 = vunpack.c.h.b16 %v462
    %v631 = vunpack.c.l.b16 %v463
    %v632 = vunpack.c.h.b16 %v463
    %v633 = vunpack.c.l.b16 %v464
    %v634 = vunpack.c.h.b16 %v464
    %v635 = vunpack.c.l.b16 %v465
    %v636 = vunpack.c.h.b16 %v465
    %v637 = vunpack.c.l.b16 %v466
    %v638 = vunpack.c.h.b16 %v466
    %v639 = vunpack.c.l.b16 %v467
    %v640 = vunpack.c.h.b16 %v467
    %v641 = vunpack.c.l.b16 %v468
    %v642 = vunpack.c.h.b16 %v468
    %v643 = vunpack.c.l.b16 %v469
    %v644 = vunpack.c.h.b16 %v469
    %v645 = vunpack.c.l.b16 %v470
    %v646 = vunpack.c.h.b16 %v470
    %v647 = vunpack.c.l.b16 %v471
    %v648 = vunpack.c.h.b16 %v471
    %v649 = vunpack.c.l.b16 %v472
    %v650 = vunpack.c.h.b16 %v472
    %v651 = vunpack.c.l.b16 %v473
    %v652 = vunpack.c.h.b16 %v473
    %v653 = vunpack.c.l.b16 %v474
    %v654 = vunpack.c.h.b16 %v474
    %v655 = vunpack.c.l.b16 %v475
    %v656 = vunpack.c.h.b16 %v475
    %v657 = vunpack.c.l.b16 %v476
    %v658 = vunpack.c.h.b16 %v476
    %v659 = vunpack.c.l.b16 %v477
    %v660 = vunpack.c.h.b16 %v477
    %v661 = vunpack.c.l.b16 %v478
    %v662 = vunpack.c.h.b16 %v478
    %v663 = vunpack.c.l.b16 %v479
    %v664 = vunpack.c.h.b16 %v479
    %v665 = vunpack.c.l.b16 %v480
    %v666 = vunpack.c.h.b16 %v480
    %v667 = vunpack.c.l.b16 %v481
    %v668 = vunpack.c.h.b16 %v481
    %v669 = vunpack.c.l.b16 %v482
    %v670 = vunpack.c.h.b16 %v482
    %v671 = vunpack.c.l.b16 %v483
    %v672 = vunpack.c.h.b16 %v483
    %v673 = vunpack.c.l.b16 %v484
    %v674 = vunpack.c.h.b16 %v484
    %v675 = vunpack.c.l.b16 %v485
    %v676 = vunpack.c.h.b16 %v485
    %v677 = vunpack.c.l.b16 %v486
    %v678 = vunpack.c.h.b16 %v486
    %v679 = vunpack.c.l.b16 %v487
    %v680 = vunpack.c.h.b16 %v487
    %v681 = vunpack.c.l.b16 %v488
    %v682 = vunpack.c.h.b16 %v488
    %v683 = vunpack.c.l.b16 %v489
    %v684 = vunpack.c.h.b16 %v489
    %v685 = vunpack.c.l.b16 %v490
    %v686 = vunpack.c.h.b16 %v490
    %v687 = vunpack.c.l.b16 %v491
    %v688 = vunpack.c.h.b16 %v491
    %v689 = vunpack.c.l.b16 %v492
    %v690 = vunpack.c.h.b16 %v492
    %v691 = vunpack.c.l.b16 %v493
    %v692 = vunpack.c.h.b16 %v493
    %v693 = vunpack.c.l.b16 %v494
    %v694 = vunpack.c.h.b16 %v494
    %v695 = vunpack.c.l.b16 %v495
    %v696 = vunpack.c.h.b16 %v495
    %v697 = vunpack.c.l.b16 %v496
    %v698 = vunpack.c.h.b16 %v496
    %v699 = vunpack.c.l.b16 %v497
    %v700 = vunpack.c.h.b16 %v497
    %v701 = vunpack.c.l.b16 %v498
    %v702 = vunpack.c.h.b16 %v498
    %v703 = vpack.c.b16 %v577, %v575
    %v704 = vpack.c.b16 %v578, %v576
    %v705 = vpack.c.b16 %v581, %v579
    %v706 = vpack.c.b16 %v582, %v580
    %v707 = vpack.c.b16 %v585, %v583
    %v708 = vpack.c.b16 %v586, %v584
    %v709 = vpack.c.b16 %v589, %v587
    %v710 = vpack.c.b16 %v590, %v588
    %v711 = vpack.c.b16 %v593, %v591
    %v712 = vpack.c.b16 %v594, %v592
    %v713 = vpack.c.b16 %v597, %v595
    %v714 = vpack.c.b16 %v598, %v596
    %v715 = vpack.c.b16 %v601, %v599
    %v716 = vpack.c.b16 %v602, %v600
    %v717 = vpack.c.b16 %v605, %v603
    %v718 = vpack.c.b16 %v606, %v604
    %v719 = vpack.c.b16 %v609, %v607
    %v720 = vpack.c.b16 %v610, %v608
    %v721 = vpack.c.b16 %v613, %v611
    %v722 = vpack.c.b16 %v614, %v612
    %v723 = vpack.c.b16 %v617, %v615
    %v724 = vpack.c.b16 %v618, %v616
    %v725 = vpack.c.b16 %v621, %v619
    %v726 = vpack.c.b16 %v622, %v620
    %v727 = vpack.c.b16 %v625, %v623
    %v728 = vpack.c.b16 %v626, %v624
    %v729 = vpack.c.b16 %v629, %v627
    %v730 = vpack.c.b16 %v630, %v628
    %v731 = vpack.c.b16 %v633, %v631
    %v732 = vpack.c.b16 %v634, %v632
    %v733 = vpack.c.b16 %v637, %v635
    %v734 = vpack.c.b16 %v638, %v636
    %v735 = vpack.c.b16 %v641, %v639
    %v736 = vpack.c.b16 %v642, %v640
    %v737 = vpack.c.b16 %v645, %v643
    %v738 = vpack.c.b16 %v646, %v644
    %v739 = vpack.c.b16 %v649, %v647
    %v740 = vpack.c.b16 %v650, %v648
    %v741 = vpack.c.b16 %v653, %v651
    %v742 = vpack.c.b16 %v654, %v652
    %v743 = vpack.c.b16 %v657, %v655
    %v744 = vpack.c.b16 %v658, %v656
    %v745 = vpack.c.b16 %v661, %v659
    %v746 = vpack.c.b16 %v662, %v660
    %v747 = vpack.c.b16 %v665, %v663
    %v748 = vpack.c.b16 %v666, %v664
    %v749 = vpack.c.b16 %v669, %v667
    %v750 = vpack.c.b16 %v670, %v668
    %v751 = vpack.c.b16 %v673, %v671
    %v752 = vpack.c.b16 %v674, %v672
    %v753 = vpack.c.b16 %v677, %v675
    %v754 = vpack.c.b16 %v678, %v676
    %v755 = vpack.c.b16 %v681, %v679
    %v756 = vpack.c.b16 %v682, %v680
    %v757 = vpack.c.b16 %v685, %v683
    %v758 = vpack.c.b16 %v686, %v684
    %v759 = vpack.c.b16 %v689, %v687
    %v760 = vpack.c.b16 %v690, %v688
    %v761 = vpack.c.b16 %v693, %v691
    %v762 = vpack.c.b16 %v694, %v692
    %v763 = vpack.c.b16 %v697, %v695
    %v764 = vpack.c.b16 %v698, %v696
    %v765 = vpack.c.b16 %v701, %v699
    %v766 = vpack.c.b16 %v702, %v700
    %831 = vmatprep.subr.bf16.mxu0 %v704
    %832 = vmatpush1.bf16.msra.mxu0 %v703
    %833 = vmatprep.subr.bf16.mxu0 %v706
    %834 = vmatpush1.bf16.msra.mxu0 %v705
    %835 = vmatprep.subr.bf16.mxu0 %v708
    %836 = vmatpush1.bf16.msra.mxu0 %v707
    %837 = vmatprep.subr.bf16.mxu0 %v710
    %838 = vmatpush1.bf16.msra.mxu0 %v709
    %839 = vmatprep.subr.bf16.mxu0 %v712
    %840 = vmatpush1.bf16.msra.mxu0 %v711
    %841 = vmatprep.subr.bf16.mxu0 %v714
    %842 = vmatpush1.bf16.msra.mxu0 %v713
    %843 = vmatprep.subr.bf16.mxu0 %v716
    %844 = vmatpush1.bf16.msra.mxu0 %v715
    %845 = vmatprep.subr.bf16.mxu0 %v718
    %846 = vmatpush1.bf16.msra.mxu0 %v717
    %847 = vmatprep.subr.bf16.mxu0 %v720
    %848 = vmatpush1.bf16.msra.mxu0 %v719
    %849 = vmatprep.subr.bf16.mxu0 %v722
    %850 = vmatpush1.bf16.msra.mxu0 %v721
    %851 = vmatprep.subr.bf16.mxu0 %v724
    %852 = vmatpush1.bf16.msra.mxu0 %v723
    %853 = vmatprep.subr.bf16.mxu0 %v726
    %854 = vmatpush1.bf16.msra.mxu0 %v725
    %855 = vmatprep.subr.bf16.mxu0 %v728
    %856 = vmatpush1.bf16.msra.mxu0 %v727
    %857 = vmatprep.subr.bf16.mxu0 %v730
    %858 = vmatpush1.bf16.msra.mxu0 %v729
    %859 = vmatprep.subr.bf16.mxu0 %v732
    %860 = vmatpush1.bf16.msra.mxu0 %v731
    %861 = vmatprep.subr.bf16.mxu0 %v734
    %862 = vmatpush1.bf16.msra.mxu0 %v733
    %863 = vmatprep.mubr.bf16.mxu0 %v432
    %864 = vmatmul.mubr.bf16.gmra.mrb[0].mxu0 %v431
    %v865 = vpop.f32.mrb[0].mxu0
    %v866 = vadd.f32 %v504, %v865
    %v867 = vpop.f32.mrb[0].mxu0
    %v868 = vadd.f32 %v508, %v867
    %v869 = vpop.f32.mrb[0].mxu0
    %v870 = vpop.f32.mrb[0].mxu0
    %871 = vdwg.mxu0
    %872 = vmatprep.subr.bf16.mxu0 %v736
    %873 = vmatpush1.bf16.msra.mxu0 %v735
    %874 = vmatprep.subr.bf16.mxu0 %v738
    %875 = vmatpush1.bf16.msra.mxu0 %v737
    %876 = vmatprep.subr.bf16.mxu0 %v740
    %877 = vmatpush1.bf16.msra.mxu0 %v739
    %878 = vmatprep.subr.bf16.mxu0 %v742
    %879 = vmatpush1.bf16.msra.mxu0 %v741
    %880 = vmatprep.subr.bf16.mxu0 %v744
    %881 = vmatpush1.bf16.msra.mxu0 %v743
    %882 = vmatprep.subr.bf16.mxu0 %v746
    %883 = vmatpush1.bf16.msra.mxu0 %v745
    %884 = vmatprep.subr.bf16.mxu0 %v748
    %885 = vmatpush1.bf16.msra.mxu0 %v747
    %886 = vmatprep.subr.bf16.mxu0 %v750
    %887 = vmatpush1.bf16.msra.mxu0 %v749
    %888 = vmatprep.subr.bf16.mxu0 %v752
    %889 = vmatpush1.bf16.msra.mxu0 %v751
    %890 = vmatprep.subr.bf16.mxu0 %v754
    %891 = vmatpush1.bf16.msra.mxu0 %v753
    %892 = vmatprep.subr.bf16.mxu0 %v756
    %893 = vmatpush1.bf16.msra.mxu0 %v755
    %894 = vmatprep.subr.bf16.mxu0 %v758
    %895 = vmatpush1.bf16.msra.mxu0 %v757
    %896 = vmatprep.subr.bf16.mxu0 %v760
    %897 = vmatpush1.bf16.msra.mxu0 %v759
    %898 = vmatprep.subr.bf16.mxu0 %v762
    %899 = vmatpush1.bf16.msra.mxu0 %v761
    %900 = vmatprep.subr.bf16.mxu0 %v764
    %901 = vmatpush1.bf16.msra.mxu0 %v763
    %902 = vmatprep.subr.bf16.mxu0 %v766
    %903 = vmatpush1.bf16.msra.mxu0 %v765
    %904 = vmatprep.mubr.bf16.mxu0 %v434
    %905 = vmatmul.mubr.bf16.gmra.mrb[0].mxu0 %v433
    %v906 = vpop.f32.mrb[0].mxu0
    %v907 = vadd.f32 %v866, %v906
    %v908 = vpop.f32.mrb[0].mxu0
    %v909 = vadd.f32 %v868, %v908
    %v910 = vpop.f32.mrb[0].mxu0
    %v911 = vpop.f32.mrb[0].mxu0
    %912 = vdwg.mxu0
    %v913 = vmax.f32 %v907, 0.0
    %v914 = vmax.f32 %v909, 0.0
    %v915 = vld [vmem:[%s7] sm:$0x3]
    %v917 = vlaneseq
    %v918 = vshrl.u32 %v917, 7
    %v919 = vsub.s32 0, %v918
    %v920 = vrot.slane %v915, %v919
    %v921 = vlaneseq
    %v922 = vshrl.u32 %v921, 7
    %v923 = vsub.s32 1, %v922
    %v924 = vrot.slane %v915, %v923
    %v927 = vmul.f32 %v913, %v920
    %v928 = vmul.f32 %v914, %v924
    %v929 = vadd.f32 %v927, %v928
    %930 = vadd.xlane.f32.xlu0 %v929
    %v931 = vpop.xlane.xlu0 %930
    %s932 = sld [smem:[#allocation2]]
    %v933 = vstv %s932
    %v934 = vadd.f32 %v931, %v933
    %vm935 = vcmask 7168
    %936 = vst.msk [vmem:[%s9] sm:$0xff] %vm935, %v934
    // Predicated region
    $region58: #{tpu_custom_call.1} parent=1 // pred_check
      _
    $region59: #{tpu_custom_call.1} parent=1 // pred_check_branch
      %938 = sbr.rel (0) target = $region61
    $region60: #{tpu_custom_call.1} parent=1 // pred_region
      _
    $region61: #{tpu_custom_call.1} parent=1 // pred_fallthru
      _
    // Predicated region
    $region62: #{tpu_custom_call.1} parent=1 // pred_check
      _
    $region63: #{tpu_custom_call.1} parent=1 // pred_check_branch
      %940 = sbr.rel (0) target = $region65
    $region64: #{tpu_custom_call.1} parent=1 // pred_region
      _
    $region65: #{tpu_custom_call.1} parent=1 // pred_fallthru
      _
    %941 = vsyncpa [#allocation4], 1
    %942 = vsyncpa [#allocation6], 1
    %943 = vsyncpa [#allocation9], 1

</llo_original>
